<compile_context>
chip_gen: v7x
topology: tpu7x:2x2x1
jax: 0.10.0
libtpu: 0.0.40
codegen_flags: <defaults>
</compile_context>

<pallas_src>
import functools

import jax
import jax.numpy as jnp
from jax.experimental import pallas as pl
from jax.experimental.pallas import tpu as pltpu

LANE = 128  # TPU vreg lane width


def mydense_kernel(w_ref, xt_ref, o_ref):
    # w_ref : (4,)        f32 in SMEM  -- folded weight chain (scalar coefficients)
    # xt_ref: (4, TILE_N) f32 in VMEM  -- batch on the 128-lane axis
    # o_ref : (1, TILE_N) f32 in VMEM  -- lane-dense output slab (unmasked stores)
    o_ref[...] = (
        xt_ref[0:1, :] * w_ref[0]
        + xt_ref[1:2, :] * w_ref[1]
        + xt_ref[2:3, :] * w_ref[2]
        + xt_ref[3:4, :] * w_ref[3]
    )


@functools.partial(jax.jit, static_argnames=("tile_n",))
def mydense_forward(x, w0, w1, w2, w3, *, tile_n=16384):
    """Forward pass of MyDense: returns x @ w0 @ w1 @ w2 @ w3 with shape (N, 1)."""
    n, k = x.shape
    assert k == 4, f"expected in_features=4, got {k}"

    # Fold the weight chain once (O(1) flops, handled by XLA in the wrapper).
    w_comb = (((w0 @ w1) @ w2) @ w3).astype(jnp.float32).reshape(4)

    # Lane-dense layout: batch on the 128-lane axis; pad N up to a tile multiple.
    tile_n = max(LANE, (tile_n // LANE) * LANE)
    tile = min(tile_n, pl.cdiv(n, LANE) * LANE)
    n_pad = pl.cdiv(n, tile) * tile

    xt = x.astype(jnp.float32).T  # (4, N)
    if n_pad != n:
        xt = jnp.pad(xt, ((0, 0), (0, n_pad - n)))

    out = pl.pallas_call(
        mydense_kernel,
        out_shape=jax.ShapeDtypeStruct((1, n_pad), jnp.float32),
        grid_spec=pltpu.PrefetchScalarGridSpec(
            num_scalar_prefetch=0,
            grid=(n_pad // tile,),
            in_specs=[
                # Folded weights: tiny (4,) f32 array, kept in SMEM for scalar reads.
                pl.BlockSpec(memory_space=pltpu.SMEM),
                # x tile: full feature dim (=4, equals array extent) x lane-dense batch tile.
                pl.BlockSpec((4, tile), lambda i: (0, i)),
            ],
            out_specs=pl.BlockSpec((1, tile), lambda i: (0, i)),
        ),
        compiler_params=pltpu.CompilerParams(
            # Batch tiles are independent -> megacore sharding on v7x, harmless elsewhere.
            dimension_semantics=("parallel",),
        ),
    )(w_comb, xt)

    # Strip padding and restore the module's (N, 1) output convention.
    return out[0, :n].reshape(n, 1)


if __name__ == "__main__":
    key = jax.random.PRNGKey(0)
    kx, k0, k1, k2, k3, kx2 = jax.random.split(key, 6)

    batch = 8
    # Deterministic "randn"-style init matching the module's parameter shapes.
    x = jax.random.normal(kx, (batch, 4), dtype=jnp.float32)
    w0 = jax.random.normal(k0, (4, 4), dtype=jnp.float32)
    w1 = jax.random.normal(k1, (4, 4), dtype=jnp.float32)
    w2 = jax.random.normal(k2, (4, 4), dtype=jnp.float32)
    w3 = jax.random.normal(k3, (4, 1), dtype=jnp.float32)

    out = jax.block_until_ready(mydense_forward(x, w0, w1, w2, w3))
    ref = x @ w0 @ w1 @ w2 @ w3
    assert out.shape == (batch, 1), out.shape
    assert jnp.allclose(out, ref, atol=1e-4, rtol=1e-4), "mismatch vs reference (batch=8)"

    # Also exercise the multi-step pipelined grid path (small tile forces >1 grid step
    # and a non-multiple-of-tile batch that requires padding).
    batch2 = 300
    x2 = jax.random.normal(kx2, (batch2, 4), dtype=jnp.float32)
    out2 = jax.block_until_ready(mydense_forward(x2, w0, w1, w2, w3, tile_n=128))
    ref2 = x2 @ w0 @ w1 @ w2 @ w3
    assert out2.shape == (batch2, 1), out2.shape
    assert jnp.allclose(out2, ref2, atol=1e-4, rtol=1e-4), "mismatch vs reference (batch=300)"

    print("KERNEL_OK")
</pallas_src>

<mosaic_0001>
module attributes {stable_mosaic.version = 11 : i64} {
  func.func @mydense_kernel(%arg0: i32, %arg1: memref<4xf32, #tpu.memory_space<smem>>, %arg2: memref<4x128xf32, #tpu.memory_space<vmem>>, %arg3: memref<1x128xf32, #tpu.memory_space<vmem>>) attributes {dimension_semantics = [#tpu.dimension_semantics<parallel>], iteration_bounds = array<i64: 1>, scalar_prefetch = 0 : i64, scratch_operands = 0 : i64, tpu.core_type = #tpu.core_type<tc>, window_params = [{transform_indices = @transform_0, window_bounds = array<i64: 4>}, {transform_indices = @transform_1, window_bounds = array<i64: 4, 128>}, {transform_indices = @transform_2, window_bounds = array<i64: 1, 128>}]} {
    %c0 = arith.constant 0 : index
    %c0_0 = arith.constant 0 : index
    %0 = vector.load %arg2[%c0, %c0_0] : memref<4x128xf32, #tpu.memory_space<vmem>>, vector<1x128xf32>
    %c0_1 = arith.constant 0 : index
    %1 = memref.load %arg1[%c0_1] : memref<4xf32, #tpu.memory_space<smem>>
    %2 = vector.broadcast %1 : f32 to vector<1x128xf32>
    %3 = arith.mulf %0, %2 : vector<1x128xf32>
    %c1 = arith.constant 1 : index
    %c0_2 = arith.constant 0 : index
    %4 = vector.load %arg2[%c1, %c0_2] : memref<4x128xf32, #tpu.memory_space<vmem>>, vector<1x128xf32>
    %c1_3 = arith.constant 1 : index
    %5 = memref.load %arg1[%c1_3] : memref<4xf32, #tpu.memory_space<smem>>
    %6 = vector.broadcast %5 : f32 to vector<1x128xf32>
    %7 = arith.mulf %4, %6 : vector<1x128xf32>
    %8 = arith.addf %3, %7 : vector<1x128xf32>
    %c2 = arith.constant 2 : index
    %c0_4 = arith.constant 0 : index
    %9 = vector.load %arg2[%c2, %c0_4] : memref<4x128xf32, #tpu.memory_space<vmem>>, vector<1x128xf32>
    %c2_5 = arith.constant 2 : index
    %10 = memref.load %arg1[%c2_5] : memref<4xf32, #tpu.memory_space<smem>>
    %11 = vector.broadcast %10 : f32 to vector<1x128xf32>
    %12 = arith.mulf %9, %11 : vector<1x128xf32>
    %13 = arith.addf %8, %12 : vector<1x128xf32>
    %c3 = arith.constant 3 : index
    %c0_6 = arith.constant 0 : index
    %14 = vector.load %arg2[%c3, %c0_6] : memref<4x128xf32, #tpu.memory_space<vmem>>, vector<1x128xf32>
    %c3_7 = arith.constant 3 : index
    %15 = memref.load %arg1[%c3_7] : memref<4xf32, #tpu.memory_space<smem>>
    %16 = vector.broadcast %15 : f32 to vector<1x128xf32>
    %17 = arith.mulf %14, %16 : vector<1x128xf32>
    %18 = arith.addf %13, %17 : vector<1x128xf32>
    %c0_8 = arith.constant 0 : index
    %c0_9 = arith.constant 0 : index
    %19 = vector.load %arg3[%c0_8, %c0_9] : memref<1x128xf32, #tpu.memory_space<vmem>>, vector<1x128xf32>
    tpu.vector_store %arg3[%c0_8, %c0_9], %18 {strides = array<i32>} : memref<1x128xf32, #tpu.memory_space<vmem>>, vector<1x128xf32>,
    return
  }
  func.func @transform_0(%arg0: i32) -> i32 {
    %c0_i32 = arith.constant 0 : i32
    %c0_i32_0 = arith.constant 0 : i32
    return %c0_i32 : i32
  }
  func.func @transform_1(%arg0: i32) -> (i32, i32) {
    %c0_i32 = arith.constant 0 : i32
    %c0_i32_0 = arith.constant 0 : i32
    return %c0_i32, %arg0 : i32, i32
  }
  func.func @transform_2(%arg0: i32) -> (i32, i32) {
    %c0_i32 = arith.constant 0 : i32
    %c0_i32_0 = arith.constant 0 : i32
    return %c0_i32, %arg0 : i32, i32
  }
}

</mosaic_0001>

<llo_original>
// kernel: mydense_forward.1
$region0: #{mydense_forward.1}
  #allocation0 [shape = 'u32[]', space=smem, size = 0x4, offset = 0x4, fixed_abs, tag = 'smem constant byte address 0x4 - core index']
  #allocation1 [shape = 'u32[144,128]{1,0:T(1,128)}', space=vmem, size = 0x12000, scoped, tag = 'internal scratch']
  %s0 = inlined_call_operand.vmem [shape: f32[4], index: 0, kind: input, shape index: {}]
  %s1 = inlined_call_operand.vmem [shape: f32[4,128], index: 1, kind: input, shape index: {}]
  %s2 = inlined_call_operand.vmem [shape: f32[1,128], index: 2, kind: output, shape index: {}]
  %s3 = sld [smem:[#allocation0]]
  $region22: #{mydense_forward.1} parent=0
    _
  %s5 = ssub.s32 1, %s3
  %s6 = scalar_select 0, %s5, %s3
  $region1: #{mydense_forward.1} parent=0
    #allocation2 [shape = 'u8[512]{0}', space=smem, size = 0x200, scoped, tag = 'input window, operand 0, single buffered']
    #allocation3 [shape = 's32[1]{0}', space=sflag, size = 0x4, scoped, tag = 'scoped memory for mydense_forward.1']
    %7 = vsyncpa [#allocation3], 0
    // Predicated region
    $region2: #{mydense_forward.1} parent=1 // pred_check
      _
    $region3: #{mydense_forward.1} parent=1 // pred_check_branch
      %9 = sbr.rel (0) target = $region5
    $region4: #{mydense_forward.1} parent=1 // pred_region
      %s11 = ssub.s32 16, 16
      %12 = vsyncadd [#allocation3], %s11
      %s14 = sshll.u32 %s0, 4
      %s15 = int_to_ptr.vmem [resolvable:$true] %s14
      %17 = dma.vmem_to_smem %s15, 16, [#allocation2], [#allocation3]
    $region5: #{mydense_forward.1} parent=1 // pred_fallthru
      _
    // Predicated region
    $region6: #{mydense_forward.1} parent=1 // pred_check
      _
    $region7: #{mydense_forward.1} parent=1 // pred_check_branch
      %19 = sbr.rel (0) target = $region9
    $region8: #{mydense_forward.1} parent=1 // pred_region
      _
    $region9: #{mydense_forward.1} parent=1 // pred_fallthru
      _
    // Predicated region
    $region10: #{mydense_forward.1} parent=1 // pred_check
      _
    $region11: #{mydense_forward.1} parent=1 // pred_check_branch
      %21 = sbr.rel (0) target = $region13
    $region12: #{mydense_forward.1} parent=1 // pred_region
      %22 = dma.done [#allocation3], 16
    $region13: #{mydense_forward.1} parent=1 // pred_fallthru
      _
    %23 = sfence
    %v24 = vld [vmem:[%s1] sm:$0x1]
    %s25 = sld [smem:[#allocation2]]
    %v26 = vstv %s25
    %v27 = vmul.f32 %v24, %v26
    %v28 = vld [vmem:[%s1 + $0x1] sm:$0x1]
    %s29 = sld [smem:[#allocation2 + $0x1]]
    %v30 = vstv %s29
    %v31 = vmul.f32 %v28, %v30
    %v32 = vadd.f32 %v27, %v31
    %v33 = vld [vmem:[%s1 + $0x2] sm:$0x1]
    %s34 = sld [smem:[#allocation2 + $0x2]]
    %v35 = vstv %s34
    %v36 = vmul.f32 %v33, %v35
    %v37 = vadd.f32 %v32, %v36
    %v38 = vld [vmem:[%s1 + $0x3] sm:$0x1]
    %s39 = sld [smem:[#allocation2 + $0x3]]
    %v40 = vstv %s39
    %v41 = vmul.f32 %v38, %v40
    %v42 = vadd.f32 %v37, %v41
    %43 = vst [vmem:[%s2] sm:$0x1] %v42
    // Predicated region
    $region14: #{mydense_forward.1} parent=1 // pred_check
      _
    $region15: #{mydense_forward.1} parent=1 // pred_check_branch
      %45 = sbr.rel (0) target = $region17
    $region16: #{mydense_forward.1} parent=1 // pred_region
      _
    $region17: #{mydense_forward.1} parent=1 // pred_fallthru
      _
    // Predicated region
    $region18: #{mydense_forward.1} parent=1 // pred_check
      _
    $region19: #{mydense_forward.1} parent=1 // pred_check_branch
      %47 = sbr.rel (0) target = $region21
    $region20: #{mydense_forward.1} parent=1 // pred_region
      _
    $region21: #{mydense_forward.1} parent=1 // pred_fallthru
      _
    %48 = vsyncpa [#allocation3], 1

</llo_original>
